<compile_context>
chip_gen: v7x
topology: tpu7x:2x2x1
jax: 0.10.0
libtpu: 0.0.40
codegen_flags: <defaults>
</compile_context>

<pallas_src>
import numpy as np
import jax
import jax.numpy as jnp
from jax.experimental import pallas as pl
from jax.experimental.pallas import tpu as pltpu


# ---------------------------------------------------------------------------
# Support construction (dual random walk), numpy glue — once per model.
# ---------------------------------------------------------------------------
def _random_walk_matrix(adj):
    # D^{-1} A  with 1/0 -> 0 (matches calculate_random_walk_matrix)
    d = adj.sum(axis=1)
    d_inv = np.where(d > 0, 1.0 / np.maximum(d, 1e-30), 0.0)
    return d_inv[:, None] * adj


def make_supports(adj, filter_type="dual_random_walk"):
    sups = []
    if filter_type == "dual_random_walk":
        sups.append(_random_walk_matrix(adj).T)
        sups.append(_random_walk_matrix(adj.T).T)
    elif filter_type == "random_walk":
        sups.append(_random_walk_matrix(adj).T)
    else:
        # TODO(synk): scaled-Laplacian filter types not implemented (only random-walk variants)
        raise NotImplementedError(filter_type)
    return np.stack(sups).astype(np.float32)


def _round_up(x, m):
    return ((x + m - 1) // m) * m


# ---------------------------------------------------------------------------
# Fused diffusion + projection kernel (node-transposed layout)
# ---------------------------------------------------------------------------
def _make_dgcn_kernel(num_supports, max_diffusion_step, b_blk, i_pad, activation):
    S, K = num_supports, max_diffusion_step

    def kernel(sup_ref, x_ref, w_ref, b_ref, o_ref):
        # sup_ref : (S, N_pad, N_pad)        A^T per support (compute dtype, resident)
        # x_ref   : (1, b_blk*i_pad, N_pad)  x^T for this batch block, rows = (b, i)
        # w_ref   : (H_pad, M*i_pad)         W^T, columns ordered (m, i) (resident)
        # b_ref   : (H_pad, 1)               bias, f32 (resident)
        # o_ref   : (1, b_blk, H_pad, N_pad) y^T per batch element
        cdt = sup_ref.dtype

        # Chebyshev diffusion chain, shared across the whole batch block.
        # Carries stay in f32 (elementwise work in f32; operands cast at dot sites).
        x0 = x_ref[0].astype(jnp.float32)                         # (C, N_pad)
        xs = [x0]
        if K > 0:
            for s in range(S):
                At = sup_ref[s]                                   # loaded once per chain
                x1 = jnp.dot(x0.astype(cdt), At,
                             preferred_element_type=jnp.float32)
                xs.append(x1)
                for _ in range(2, K + 1):
                    # 2*(A @ x1) - x0 : the "2*" is a VPU scale, no 2*A operand.
                    x2 = 2.0 * jnp.dot(x1.astype(cdt), At,
                                       preferred_element_type=jnp.float32) - x0
                    xs.append(x2)
                    x1, x0 = x2, x1        # PyTorch x0/x1 rebinding quirk (carried across supports)

        w_t = w_ref[...]                                          # hoisted out of batch loop
        bias = b_ref[...]                                         # (H_pad, 1) f32
        # Projection: one deep (M*i_pad-contraction) matmul per batch element.
        # b_blk <= 8 and each body is tiny, so this static unroll is harmless;
        # all slices below are sublane-dim slices at 8-aligned offsets.
        for b in range(b_blk):
            lo = b * i_pad
            rhs = jnp.concatenate([xk[lo:lo + i_pad, :] for xk in xs],
                                  axis=0).astype(cdt)             # (M*i_pad, N_pad)
            y_t = jnp.dot(w_t, rhs,
                          preferred_element_type=jnp.float32)     # (H_pad, N_pad)
            y_t = y_t + bias
            y_t = jnp.tanh(y_t) if activation == "tanh" else jnp.maximum(y_t, 0.0)
            o_ref[0, b] = y_t.astype(o_ref.dtype)

    return kernel


# ---------------------------------------------------------------------------
# Per-model preparation (hoisted out of the per-timestep forward)
# ---------------------------------------------------------------------------
def prepare_dgcn_params(supports, weights, biases, input_size, hidden_dim,
                        max_diffusion_step, compute_dtype=jnp.float32):
    S, N, _ = supports.shape
    K = int(max_diffusion_step)
    M = S * K + 1
    H = int(hidden_dim)
    I = int(input_size)
    assert weights.shape == (I * M, H)

    N_pad = _round_up(N, 128)          # lane-dense supports / node axis
    H_pad = _round_up(H, 128)          # sublane-friendly hidden axis
    I_pad = _round_up(I, 8)            # sublane-aligned per-batch feature stride
    cdt = compute_dtype

    # transposed supports: diffusion is computed as x^T @ A^T
    sup_t = jnp.pad(jnp.asarray(supports, jnp.float32),
                    ((0, 0), (0, N_pad - N), (0, N_pad - N)))
    sup_t = jnp.transpose(sup_t, (0, 2, 1)).astype(cdt)

    # weights: original row index i*M + m  ->  W^T column m*I_pad + i
    w_r = jnp.asarray(weights, jnp.float32).reshape(I, M, H).transpose(1, 0, 2)
    w_r = jnp.pad(w_r, ((0, 0), (0, I_pad - I), (0, H_pad - H)))   # (M, I_pad, H_pad)
    w_t = w_r.reshape(M * I_pad, H_pad).T.astype(cdt)              # (H_pad, M*I_pad)

    b_p = jnp.pad(jnp.asarray(biases, jnp.float32),
                  (0, H_pad - H)).reshape(H_pad, 1)

    return dict(sup_t=sup_t, w_t=w_t, b_p=b_p, N=N, N_pad=N_pad, H=H, H_pad=H_pad,
                I=I, I_pad=I_pad, S=S, K=K, M=M, cdt=cdt)


# ---------------------------------------------------------------------------
# Per-timestep forward
# ---------------------------------------------------------------------------
def dgcn_forward(inputs, state_t, params, activation="tanh", batch_block=None,
                 out_dtype=jnp.float32):
    p = params
    B, N, _ = inputs.shape
    assert N == p["N"]
    I, I_pad, N_pad = p["I"], p["I_pad"], p["N_pad"]
    H, H_pad = p["H"], p["H_pad"]
    S, K, M, cdt = p["S"], p["K"], p["M"], p["cdt"]

    x = jnp.concatenate([inputs, state_t], axis=2)                 # (B, N, I)
    assert x.shape[2] == I

    # Batch block: as large as allowed, but keep >= 2 grid steps when the batch
    # allows so dimension_semantics=("parallel",) can shard across v7x's 2 TCs.
    if batch_block is None:
        b_blk = max(1, min(8, B))
        while b_blk > 1 and (B + b_blk - 1) // b_blk < 2:
            b_blk = max(1, b_blk // 2)
    else:
        b_blk = max(1, min(int(batch_block), B))
    B_pad = _round_up(B, b_blk)
    G = B_pad // b_blk
    C = b_blk * I_pad

    # Pack x as x^T: rows = (batch-in-block, feature), lanes = nodes.
    x_p = jnp.pad(x.astype(jnp.float32),
                  ((0, B_pad - B), (0, N_pad - N), (0, I_pad - I)))
    x_t = jnp.transpose(x_p, (0, 2, 1)).reshape(G, C, N_pad).astype(cdt)

    # VMEM budget from the actual footprint (double-buffered blocks + temporaries),
    # with headroom, capped at v7x's 64 MiB/TC.
    isz = jnp.dtype(cdt).itemsize
    resident = 2 * (S * N_pad * N_pad * isz + H_pad * M * I_pad * isz + H_pad * 128 * 4)
    per_step = 2 * (C * N_pad * isz + b_blk * H_pad * N_pad * 4)
    temps = (M + 3) * C * N_pad * 4 + (M * I_pad + 2 * H_pad) * N_pad * 4
    vmem_limit = int(min(64 * 1024 * 1024,
                         max(32 * 1024 * 1024, (resident + per_step + temps) * 3 // 2)))

    flops = 2 * G * (S * K * C * N_pad * N_pad + b_blk * M * I_pad * N_pad * H_pad)
    transc = G * b_blk * N_pad * H_pad if activation == "tanh" else 0
    bytes_acc = ((p["sup_t"].size + p["w_t"].size + x_t.size) * isz
                 + p["b_p"].size * 4
                 + G * b_blk * H_pad * N_pad * jnp.dtype(out_dtype).itemsize)
    cost = pl.CostEstimate(flops=int(flops), transcendentals=int(transc),
                           bytes_accessed=int(bytes_acc))

    kernel = _make_dgcn_kernel(S, K, b_blk, I_pad, activation)

    out = pl.pallas_call(
        kernel,
        out_shape=jax.ShapeDtypeStruct((G, b_blk, H_pad, N_pad), out_dtype),
        grid_spec=pltpu.PrefetchScalarGridSpec(
            num_scalar_prefetch=0,
            grid=(G,),
            in_specs=[
                pl.BlockSpec((S, N_pad, N_pad), lambda g: (0, 0, 0)),   # A^T (resident)
                pl.BlockSpec((1, C, N_pad), lambda g: (g, 0, 0)),       # x^T block (streamed)
                pl.BlockSpec((H_pad, M * I_pad), lambda g: (0, 0)),     # W^T (resident)
                pl.BlockSpec((H_pad, 1), lambda g: (0, 0)),             # bias (resident)
            ],
            out_specs=pl.BlockSpec((1, b_blk, H_pad, N_pad), lambda g: (g, 0, 0, 0)),
        ),
        compiler_params=pltpu.CompilerParams(
            dimension_semantics=("parallel",),      # batch blocks are independent
            vmem_limit_bytes=vmem_limit,
        ),
        cost_estimate=cost,
    )(p["sup_t"], x_t, p["w_t"], p["b_p"])

    # (G, b_blk, H_pad, N_pad) -> (B, N, H)
    out = jnp.transpose(out, (0, 1, 3, 2)).reshape(B_pad, N_pad, H_pad)
    return out[:B, :N, :H]


# ---------------------------------------------------------------------------
# Pure-JAX reference (mirrors the PyTorch code exactly, for correctness check)
# ---------------------------------------------------------------------------
def dgcn_reference(inputs, state_t, supports, weights, biases, K, activation="tanh"):
    B, N, _ = inputs.shape
    x = jnp.concatenate([inputs, state_t], axis=2)
    input_size = x.shape[2]
    x0 = jnp.transpose(x, (1, 2, 0)).reshape(N, input_size * B)
    xs = [x0]
    if K > 0:
        for s in range(supports.shape[0]):
            A = supports[s]
            x1 = A @ x0
            xs.append(x1)
            for _ in range(2, K + 1):
                x2 = 2.0 * (A @ x1) - x0
                xs.append(x2)
                x1, x0 = x2, x1
    xst = jnp.stack(xs, 0)
    M = xst.shape[0]
    xr = xst.reshape(M, N, input_size, B)
    xr = jnp.transpose(xr, (3, 1, 2, 0)).reshape(B * N, input_size * M)
    y = xr @ weights + biases
    y = jnp.tanh(y) if activation == "tanh" else jax.nn.relu(y)
    return y.reshape(B, N, weights.shape[1])


# ---------------------------------------------------------------------------
if __name__ == "__main__":
    batch = 2
    num_nodes = 16
    input_dim = 4
    hidden_dim = 32
    max_diffusion_step = 2
    filter_type = "dual_random_walk"

    key = jax.random.PRNGKey(0)
    k_adj, k_in, k_st, k_w = jax.random.split(key, 4)

    # deterministic adjacency (non-negative, sparsified)
    adj = jax.random.uniform(k_adj, (num_nodes, num_nodes), dtype=jnp.float32)
    adj = jnp.where(adj > 0.5, adj, 0.0)
    supports = jnp.asarray(make_supports(np.asarray(adj, np.float64), filter_type))

    num_supports = supports.shape[0]
    num_matrices = num_supports * max_diffusion_step + 1
    input_size = input_dim + hidden_dim

    # parameters: xavier_normal_-like weights, zero biases (deterministic)
    fan_in = input_size * num_matrices
    std = float(np.sqrt(2.0 / (fan_in + hidden_dim)))
    weights = std * jax.random.normal(k_w, (fan_in, hidden_dim), dtype=jnp.float32)
    biases = jnp.zeros((hidden_dim,), dtype=jnp.float32)

    inputs = jax.random.normal(k_in, (batch, num_nodes, input_dim), dtype=jnp.float32)
    state_t = jax.random.normal(k_st, (batch, num_nodes, hidden_dim), dtype=jnp.float32)

    ref = jax.block_until_ready(
        dgcn_reference(inputs, state_t, supports, weights, biases,
                       max_diffusion_step, activation="tanh"))

    # f32, auto batch blocking (b_blk=1 -> grid of 2 parallel steps)
    params_f32 = prepare_dgcn_params(supports, weights, biases, input_size,
                                     hidden_dim, max_diffusion_step,
                                     compute_dtype=jnp.float32)
    out = jax.block_until_ready(dgcn_forward(inputs, state_t, params_f32, "tanh"))
    assert out.shape == (batch, num_nodes, hidden_dim), out.shape
    np.testing.assert_allclose(np.asarray(out), np.asarray(ref), rtol=2e-3, atol=2e-3)

    # f32, batch packed into one block (b_blk=2, grid=1) — exercises b>0 slicing
    out_p = jax.block_until_ready(
        dgcn_forward(inputs, state_t, params_f32, "tanh", batch_block=2))
    np.testing.assert_allclose(np.asarray(out_p), np.asarray(ref), rtol=2e-3, atol=2e-3)

    # ragged batch (padding path): batch=3 with b_blk=2 -> B_pad=4, grid=2
    inputs3 = jax.random.normal(jax.random.PRNGKey(7), (3, num_nodes, input_dim),
                                dtype=jnp.float32)
    state3 = jax.random.normal(jax.random.PRNGKey(8), (3, num_nodes, hidden_dim),
                               dtype=jnp.float32)
    ref3 = jax.block_until_ready(
        dgcn_reference(inputs3, state3, supports, weights, biases,
                       max_diffusion_step, activation="tanh"))
    out3 = jax.block_until_ready(
        dgcn_forward(inputs3, state3, params_f32, "tanh", batch_block=2))
    np.testing.assert_allclose(np.asarray(out3), np.asarray(ref3), rtol=2e-3, atol=2e-3)

    # bf16 operands / f32 accumulation + f32 elementwise (loose tolerance)
    params_bf16 = prepare_dgcn_params(supports, weights, biases, input_size,
                                      hidden_dim, max_diffusion_step,
                                      compute_dtype=jnp.bfloat16)
    out_bf = jax.block_until_ready(
        dgcn_forward(inputs, state_t, params_bf16, "tanh", batch_block=2))
    np.testing.assert_allclose(np.asarray(out_bf), np.asarray(ref), rtol=5e-2, atol=1e-1)

    print("KERNEL_OK")
</pallas_src>

<mosaic_0001>
module attributes {stable_mosaic.version = 11 : i64} {
  func.func @kernel(%arg0: i32, %arg1: memref<2x128x128xf32, #tpu.memory_space<vmem>>, %arg2: memref<1x40x128xf32, #tpu.memory_space<vmem>>, %arg3: memref<128x200xf32, #tpu.memory_space<vmem>>, %arg4: memref<128x1xf32, #tpu.memory_space<vmem>>, %arg5: memref<1x1x128x128xf32, #tpu.memory_space<vmem>>) attributes {dimension_semantics = [#tpu.dimension_semantics<parallel>], iteration_bounds = array<i64: 2>, scalar_prefetch = 0 : i64, scratch_operands = 0 : i64, tpu.core_type = #tpu.core_type<tc>, window_params = [{pipeline_mode = #tpu.pipeline_mode<synchronous>, transform_indices = @transform_0, window_bounds = array<i64: 2, 128, 128>}, {transform_indices = @transform_1, window_bounds = array<i64: 1, 40, 128>}, {pipeline_mode = #tpu.pipeline_mode<synchronous>, transform_indices = @transform_2, window_bounds = array<i64: 128, 200>}, {pipeline_mode = #tpu.pipeline_mode<synchronous>, transform_indices = @transform_3, window_bounds = array<i64: 128, 1>}, {transform_indices = @transform_4, window_bounds = array<i64: 1, 1, 128, 128>}]} {
    %c0 = arith.constant 0 : index
    %c0_0 = arith.constant 0 : index
    %c0_1 = arith.constant 0 : index
    %0 = vector.load %arg2[%c0, %c0_0, %c0_1] : memref<1x40x128xf32, #tpu.memory_space<vmem>>, vector<1x40x128xf32>
    %1 = vector.shape_cast %0 : vector<1x40x128xf32> to vector<40x128xf32>
    %c0_2 = arith.constant 0 : index
    %c0_3 = arith.constant 0 : index
    %c0_4 = arith.constant 0 : index
    %2 = vector.load %arg1[%c0_2, %c0_3, %c0_4] : memref<2x128x128xf32, #tpu.memory_space<vmem>>, vector<1x128x128xf32>
    %3 = vector.shape_cast %2 : vector<1x128x128xf32> to vector<128x128xf32>
    %cst = arith.constant dense<0.000000e+00> : vector<40x128xf32>
    %4 = tpu.matmul %1, %3, %cst {dimension_numbers = #tpu.dot_dimension_numbers<[1], [0], [0], [1], [0, 0, 1, 1], [], []>} : vector<40x128xf32>, vector<128x128xf32>, vector<40x128xf32> -> vector<40x128xf32>
    %cst_5 = arith.constant dense<0.000000e+00> : vector<40x128xf32>
    %5 = tpu.matmul %4, %3, %cst_5 {dimension_numbers = #tpu.dot_dimension_numbers<[1], [0], [0], [1], [0, 0, 1, 1], [], []>} : vector<40x128xf32>, vector<128x128xf32>, vector<40x128xf32> -> vector<40x128xf32>
    %cst_6 = arith.constant 2.000000e+00 : f32
    %6 = vector.broadcast %cst_6 : f32 to vector<40x128xf32>
    %7 = arith.mulf %6, %5 : vector<40x128xf32>
    %8 = arith.subf %7, %1 : vector<40x128xf32>
    %c1 = arith.constant 1 : index
    %c0_7 = arith.constant 0 : index
    %c0_8 = arith.constant 0 : index
    %9 = vector.load %arg1[%c1, %c0_7, %c0_8] : memref<2x128x128xf32, #tpu.memory_space<vmem>>, vector<1x128x128xf32>
    %10 = vector.shape_cast %9 : vector<1x128x128xf32> to vector<128x128xf32>
    %cst_9 = arith.constant dense<0.000000e+00> : vector<40x128xf32>
    %11 = tpu.matmul %4, %10, %cst_9 {dimension_numbers = #tpu.dot_dimension_numbers<[1], [0], [0], [1], [0, 0, 1, 1], [], []>} : vector<40x128xf32>, vector<128x128xf32>, vector<40x128xf32> -> vector<40x128xf32>
    %cst_10 = arith.constant dense<0.000000e+00> : vector<40x128xf32>
    %12 = tpu.matmul %11, %10, %cst_10 {dimension_numbers = #tpu.dot_dimension_numbers<[1], [0], [0], [1], [0, 0, 1, 1], [], []>} : vector<40x128xf32>, vector<128x128xf32>, vector<40x128xf32> -> vector<40x128xf32>
    %cst_11 = arith.constant 2.000000e+00 : f32
    %13 = vector.broadcast %cst_11 : f32 to vector<40x128xf32>
    %14 = arith.mulf %13, %12 : vector<40x128xf32>
    %15 = arith.subf %14, %4 : vector<40x128xf32>
    %c0_12 = arith.constant 0 : index
    %c0_13 = arith.constant 0 : index
    %16 = vector.load %arg3[%c0_12, %c0_13] : memref<128x200xf32, #tpu.memory_space<vmem>>, vector<128x200xf32>
    %c0_14 = arith.constant 0 : index
    %c0_15 = arith.constant 0 : index
    %17 = vector.load %arg4[%c0_14, %c0_15] : memref<128x1xf32, #tpu.memory_space<vmem>>, vector<128x1xf32>
    %18 = tpu.concatenate %1, %4, %8, %11, %15 in 0 : vector<40x128xf32>, vector<40x128xf32>, vector<40x128xf32>, vector<40x128xf32>, vector<40x128xf32> -> vector<200x128xf32>
    %cst_16 = arith.constant dense<0.000000e+00> : vector<128x128xf32>
    %19 = tpu.matmul %16, %18, %cst_16 {dimension_numbers = #tpu.dot_dimension_numbers<[1], [0], [0], [1], [0, 0, 1, 1], [], []>} : vector<128x200xf32>, vector<200x128xf32>, vector<128x128xf32> -> vector<128x128xf32>
    %20 = vector.broadcast %17 : vector<128x1xf32> to vector<128x128xf32>
    %21 = arith.addf %19, %20 : vector<128x128xf32>
    %22 = math.tanh %21 : vector<128x128xf32>
    %c0_17 = arith.constant 0 : index
    %c0_18 = arith.constant 0 : index
    %c0_19 = arith.constant 0 : index
    %c0_20 = arith.constant 0 : index
    %23 = vector.load %arg5[%c0_17, %c0_18, %c0_19, %c0_20] : memref<1x1x128x128xf32, #tpu.memory_space<vmem>>, vector<1x1x128x128xf32>
    %24 = vector.shape_cast %23 : vector<1x1x128x128xf32> to vector<128x128xf32>
    %25 = vector.shape_cast %22 : vector<128x128xf32> to vector<1x1x128x128xf32>
    tpu.vector_store %arg5[%c0_17, %c0_18, %c0_19, %c0_20], %25 {strides = array<i32>} : memref<1x1x128x128xf32, #tpu.memory_space<vmem>>, vector<1x1x128x128xf32>,
    return
  }
  func.func @transform_0(%arg0: i32) -> (i32, i32, i32) {
    %c0_i32 = arith.constant 0 : i32
    %c0_i32_0 = arith.constant 0 : i32
    %c0_i32_1 = arith.constant 0 : i32
    %c0_i32_2 = arith.constant 0 : i32
    return %c0_i32, %c0_i32_0, %c0_i32_1 : i32, i32, i32
  }
  func.func @transform_1(%arg0: i32) -> (i32, i32, i32) {
    %c0_i32 = arith.constant 0 : i32
    %c0_i32_0 = arith.constant 0 : i32
    %c0_i32_1 = arith.constant 0 : i32
    return %arg0, %c0_i32, %c0_i32_0 : i32, i32, i32
  }
  func.func @transform_2(%arg0: i32) -> (i32, i32) {
    %c0_i32 = arith.constant 0 : i32
    %c0_i32_0 = arith.constant 0 : i32
    %c0_i32_1 = arith.constant 0 : i32
    return %c0_i32, %c0_i32_0 : i32, i32
  }
  func.func @transform_3(%arg0: i32) -> (i32, i32) {
    %c0_i32 = arith.constant 0 : i32
    %c0_i32_0 = arith.constant 0 : i32
    %c0_i32_1 = arith.constant 0 : i32
    return %c0_i32, %c0_i32_0 : i32, i32
  }
  func.func @transform_4(%arg0: i32) -> (i32, i32, i32, i32) {
    %c0_i32 = arith.constant 0 : i32
    %c0_i32_0 = arith.constant 0 : i32
    %c0_i32_1 = arith.constant 0 : i32
    %c0_i32_2 = arith.constant 0 : i32
    return %arg0, %c0_i32, %c0_i32_0, %c0_i32_1 : i32, i32, i32, i32
  }
}

</mosaic_0001>

<llo_original>
// kernel: tpu_custom_call.1
$region0: #{tpu_custom_call.1}
  #allocation0 [shape = 'u32[]', space=smem, size = 0x4, offset = 0x4, fixed_abs, tag = 'smem constant byte address 0x4 - core index']
  #allocation1 [shape = 'u32[144,128]{1,0:T(1,128)}', space=vmem, size = 0x12000, scoped, tag = 'internal scratch']
  %s0 = inlined_call_operand.vmem [shape: f32[2,128,128], index: 0, kind: input, shape index: {}]
  %s1 = inlined_call_operand.vmem [shape: f32[2,40,128], index: 1, kind: input, shape index: {}]
  %s2 = inlined_call_operand.vmem [shape: f32[128,200], index: 2, kind: input, shape index: {}]
  %s3 = inlined_call_operand.vmem [shape: f32[128,1], index: 3, kind: input, shape index: {}]
  %s4 = inlined_call_operand.hbm [shape: f32[2,1,128,128], index: 4, kind: output, shape index: {}]
  %s5 = sld [smem:[#allocation0]]
  $region49: #{tpu_custom_call.1} parent=0
    _
  %s7 = ssub.s32 1, %s5
  %s8 = scalar_select 0, %s7, %s5
  $region1: #{tpu_custom_call.1} parent=0
    #allocation2 [shape = 'u8[131072]{0}', space=vmem, size = 0x20000, scoped, tag = 'output window, operand 0']
    #allocation3 [shape = 's32[2]{0}', space=sflag, size = 0x8, scoped, tag = 'scoped memory for tpu_custom_call.1']
    %9 = vsyncpa [#allocation3], 0
    %s10 = scalar_lea.sflag [#allocation3], 1
    %11 = vsyncpa %s10, 0
    loop: start=0, step=1, limit=4
    $region2: #{tpu_custom_call.1} parent=1 // loop_pre_header
      _
    $region3: #{tpu_custom_call.1} parent=1 // loop_header
      %s13 = sphi 0, %s17
      %p14 = scmp.ge.s32.totalorder %s13, 4
      %s21 = sphi 0, %s21
      %s23 = sphi 0, %s21
      %s24 = sphi 0, %s23
      %s38 = sphi 0, %s24
      %s44 = sphi 0, %s46
      %s47 = sphi 0, %s44
      %s48 = sphi 0, %s47
      %s64 = sphi 0, %s48
      %s68 = sphi 0, %s68
      %s70 = sphi 0, %s68
      %s71 = sphi 0, %s70
      %s85 = sphi 0, %s71
      %s89 = sphi 0, %s89
      %s91 = sphi 0, %s89
      %s92 = sphi 0, %s91
      %s106 = sphi 0, %s92
      %s112 = sphi 0, %s114
      %s115 = sphi 0, %s112
      %s116 = sphi 0, %s115
      %s132 = sphi 0, %s116
    $region4: #{tpu_custom_call.1} parent=1 // loop_header_branch
      %16 = sbr.rel (%p14) target = $region8
    $region5: #{tpu_custom_call.1} parent=1 // loop_body
      %s18 = ssub.s32 %s13, 1
      %s19 = ssub.s32 %s13, 2
      %s20 = sadd.s32 %s13, 1
      %s22 = sadd.s32 %s21, 1
      %p25 = scmp.eq.s32.totalorder %s13, 1
      %p26 = scmp.ne.s32.totalorder %s21, %s23
      %p27 = scmp.eq.s32.totalorder %s13, 0
      %p28 = por %p26, %p27
      %p29 = scmp.ne.s32.totalorder %s21, %s23
      %p30 = scmp.eq.s32.totalorder %s18, 1
      %p31 = por %p29, %p30
      %p32 = scmp.ne.s32.totalorder %s23, %s24
      %p33 = scmp.eq.s32.totalorder %s18, 0
      %p34 = por %p32, %p33
      %p35 = scmp.ne.s32.totalorder %s23, %s24
      %p36 = scmp.eq.s32.totalorder %s19, 1
      %p37 = por %p35, %p36
      %p39 = scmp.ne.s32.totalorder %s24, %s38
      %p40 = scmp.eq.s32.totalorder %s19, 0
      %p41 = por %p39, %p40
      %s42 = ssub.s32 %s13, %s20
      %p43 = scmp.eq.s32.totalorder %s42, 0
      %s45 = sadd.s32 %s44, 1
      %s46 = scalar_select %p43, %s44, %s45
      %p49 = pneg %p43
      %p50 = scmp.eq.s32.totalorder %s13, 1
      %p51 = por %p49, %p50
      %p52 = scmp.ne.s32.totalorder %s44, %s47
      %p53 = scmp.eq.s32.totalorder %s13, 0
      %p54 = por %p52, %p53
      %p55 = scmp.ne.s32.totalorder %s44, %s47
      %p56 = scmp.eq.s32.totalorder %s18, 1
      %p57 = por %p55, %p56
      %p58 = scmp.ne.s32.totalorder %s47, %s48
      %p59 = scmp.eq.s32.totalorder %s18, 0
      %p60 = por %p58, %p59
      %p61 = scmp.ne.s32.totalorder %s47, %s48
      %p62 = scmp.eq.s32.totalorder %s19, 1
      %p63 = por %p61, %p62
      %p65 = scmp.ne.s32.totalorder %s48, %s64
      %p66 = scmp.eq.s32.totalorder %s19, 0
      %p67 = por %p65, %p66
      %s69 = sadd.s32 %s68, 1
      %p72 = scmp.eq.s32.totalorder %s13, 1
      %p73 = scmp.ne.s32.totalorder %s68, %s70
      %p74 = scmp.eq.s32.totalorder %s13, 0
      %p75 = por %p73, %p74
      %p76 = scmp.ne.s32.totalorder %s68, %s70
      %p77 = scmp.eq.s32.totalorder %s18, 1
      %p78 = por %p76, %p77
      %p79 = scmp.ne.s32.totalorder %s70, %s71
      %p80 = scmp.eq.s32.totalorder %s18, 0
      %p81 = por %p79, %p80
      %p82 = scmp.ne.s32.totalorder %s70, %s71
      %p83 = scmp.eq.s32.totalorder %s19, 1
      %p84 = por %p82, %p83
      %p86 = scmp.ne.s32.totalorder %s71, %s85
      %p87 = scmp.eq.s32.totalorder %s19, 0
      %p88 = por %p86, %p87
      %s90 = sadd.s32 %s89, 1
      %p93 = scmp.eq.s32.totalorder %s13, 1
      %p94 = scmp.ne.s32.totalorder %s89, %s91
      %p95 = scmp.eq.s32.totalorder %s13, 0
      %p96 = por %p94, %p95
      %p97 = scmp.ne.s32.totalorder %s89, %s91
      %p98 = scmp.eq.s32.totalorder %s18, 1
      %p99 = por %p97, %p98
      %p100 = scmp.ne.s32.totalorder %s91, %s92
      %p101 = scmp.eq.s32.totalorder %s18, 0
      %p102 = por %p100, %p101
      %p103 = scmp.ne.s32.totalorder %s91, %s92
      %p104 = scmp.eq.s32.totalorder %s19, 1
      %p105 = por %p103, %p104
      %p107 = scmp.ne.s32.totalorder %s92, %s106
      %p108 = scmp.eq.s32.totalorder %s19, 0
      %p109 = por %p107, %p108
      %s110 = ssub.s32 %s13, %s20
      %p111 = scmp.eq.s32.totalorder %s110, 0
      %s113 = sadd.s32 %s112, 1
      %s114 = scalar_select %p111, %s112, %s113
      %p117 = pneg %p111
      %p118 = scmp.eq.s32.totalorder %s13, 1
      %p119 = por %p117, %p118
      %p120 = scmp.ne.s32.totalorder %s112, %s115
      %p121 = scmp.eq.s32.totalorder %s13, 0
      %p122 = por %p120, %p121
      %p123 = scmp.ne.s32.totalorder %s112, %s115
      %p124 = scmp.eq.s32.totalorder %s18, 1
      %p125 = por %p123, %p124
      %p126 = scmp.ne.s32.totalorder %s115, %s116
      %p127 = scmp.eq.s32.totalorder %s18, 0
      %p128 = por %p126, %p127
      %p129 = scmp.ne.s32.totalorder %s115, %s116
      %p130 = scmp.eq.s32.totalorder %s19, 1
      %p131 = por %p129, %p130
      %p133 = scmp.ne.s32.totalorder %s116, %s132
      %p134 = scmp.eq.s32.totalorder %s19, 0
      %p135 = por %p133, %p134
      %p136 = scmp.le.s32.totalorder 1, %s13
      %p137 = scmp.lt.s32.totalorder %s13, 3
      %p138 = pnand %p136, %p137
      %p139 = pneg %p138
      // Predicated region
      $region9: #{tpu_custom_call.1} parent=5 // pred_check
        _
      $region10: #{tpu_custom_call.1} parent=5 // pred_check_branch
        %141 = sbr.rel (%p138) target = $region12
      $region11: #{tpu_custom_call.1} parent=5 // pred_region
        %s142 = ssub.s32 %s13, 1
        // Predicated region
        $region13: #{tpu_custom_call.1} parent=11 // pred_check
          %p143 = pneg %p34
        $region14: #{tpu_custom_call.1} parent=11 // pred_check_branch
          %145 = sbr.rel (%p143) target = $region16
        $region15: #{tpu_custom_call.1} parent=11 // pred_region
          _
        $region16: #{tpu_custom_call.1} parent=11 // pred_fallthru
          _
        // Predicated region
        $region17: #{tpu_custom_call.1} parent=11 // pred_check
          %p146 = pneg %p81
        $region18: #{tpu_custom_call.1} parent=11 // pred_check_branch
          %148 = sbr.rel (%p146) target = $region20
        $region19: #{tpu_custom_call.1} parent=11 // pred_region
          _
        $region20: #{tpu_custom_call.1} parent=11 // pred_fallthru
          _
        // Predicated region
        $region21: #{tpu_custom_call.1} parent=11 // pred_check
          %p149 = pneg %p102
        $region22: #{tpu_custom_call.1} parent=11 // pred_check_branch
          %151 = sbr.rel (%p149) target = $region24
        $region23: #{tpu_custom_call.1} parent=11 // pred_region
          _
        $region24: #{tpu_custom_call.1} parent=11 // pred_fallthru
          _
      $region12: #{tpu_custom_call.1} parent=5 // pred_fallthru
        _
      %p152 = scmp.lt.s32.totalorder %s13, 2
      // Predicated region
      $region25: #{tpu_custom_call.1} parent=5 // pred_check
        %p153 = pneg %p152
      $region26: #{tpu_custom_call.1} parent=5 // pred_check_branch
        %155 = sbr.rel (%p153) target = $region28
      $region27: #{tpu_custom_call.1} parent=5 // pred_region
        // Predicated region
        $region29: #{tpu_custom_call.1} parent=27 // pred_check
          %p156 = pneg %p54
        $region30: #{tpu_custom_call.1} parent=27 // pred_check_branch
          %158 = sbr.rel (%p156) target = $region32
        $region31: #{tpu_custom_call.1} parent=27 // pred_region
          %p159 = scmp.lt.s32.totalorder %s13, 1
          %s160 = scalar_select %p159, %s13, 1
          %s161 = smul.addr %s160, 5
          %s162 = smul.addr %s161, 8
          %s163 = scalar_lea.vmem %s1, %s162
        $region32: #{tpu_custom_call.1} parent=27 // pred_fallthru
          _
      $region28: #{tpu_custom_call.1} parent=5 // pred_fallthru
        _
      %p164 = scmp.le.s32.totalorder 1, %s13
      %p165 = scmp.lt.s32.totalorder %s13, 3
      %p166 = pnand %p164, %p165
      %p167 = pneg %p166
      // Predicated region
      $region33: #{tpu_custom_call.1} parent=5 // pred_check
        _
      $region34: #{tpu_custom_call.1} parent=5 // pred_check_branch
        %169 = sbr.rel (%p166) target = $region36
      $region35: #{tpu_custom_call.1} parent=5 // pred_region
        %s170 = ssub.s32 %s13, 1
        %p171 = pneg %p34
        %p172 = pneg %p31
        %p173 = scmp.lt.s32.totalorder %s18, 1
        %s174 = scalar_select %p173, %s18, 1
        %s175 = smul.addr %s174, 5
        %s176 = smul.addr %s175, 8
        %s177 = scalar_lea.vmem %s1, %s176
        %p178 = pneg %p60
        %p179 = pneg %p57
        %p180 = pneg %p81
        %p181 = pneg %p78
        %p182 = pneg %p102
        %p183 = pneg %p99
        %p184 = pneg %p128
        %p185 = pneg %p125
        %s186 = sand.u32 %s115, 1
        %s187 = scalar_lea.sflag [#allocation3], %s186
        %s188 = sand.u32 %s115, 1
        %s189 = smul.addr %s188, 128
        %s190 = scalar_lea.vmem [#allocation2], %s189
        %p191 = scmp.lt.s32.totalorder %s18, 1
        %s192 = scalar_select %p191, %s18, 1
        %s193 = smul.addr %s192, 5
        %s194 = smul.addr %s193, 8
        %s195 = scalar_lea.vmem %s1, %s194
        %v196 = vld [vmem:[%s195] sm:$0xff]
        %v197 = vld [vmem:[%s195 + $0x8] sm:$0xff]
        %v198 = vld [vmem:[%s195 + $0x10] sm:$0xff]
        %v199 = vld [vmem:[%s195 + $0x18] sm:$0xff]
        %v200 = vld [vmem:[%s195 + $0x20] sm:$0xff]
        %v201 = vld [vmem:[%s0] sm:$0xff]
        %v202 = vld [vmem:[%s0 + $0x8] sm:$0xff]
        %v203 = vld [vmem:[%s0 + $0x10] sm:$0xff]
        %v204 = vld [vmem:[%s0 + $0x18] sm:$0xff]
        %v205 = vld [vmem:[%s0 + $0x20] sm:$0xff]
        %v206 = vld [vmem:[%s0 + $0x28] sm:$0xff]
        %v207 = vld [vmem:[%s0 + $0x30] sm:$0xff]
        %v208 = vld [vmem:[%s0 + $0x38] sm:$0xff]
        %v209 = vld [vmem:[%s0 + $0x40] sm:$0xff]
        %v210 = vld [vmem:[%s0 + $0x48] sm:$0xff]
        %v211 = vld [vmem:[%s0 + $0x50] sm:$0xff]
        %v212 = vld [vmem:[%s0 + $0x58] sm:$0xff]
        %v213 = vld [vmem:[%s0 + $0x60] sm:$0xff]
        %v214 = vld [vmem:[%s0 + $0x68] sm:$0xff]
        %v215 = vld [vmem:[%s0 + $0x70] sm:$0xff]
        %v216 = vld [vmem:[%s0 + $0x78] sm:$0xff]
        %217 = vmatprep.subr.mxu0 0.0
        %218 = vmatpush1.msra.mxu0 %v201
        %219 = vmatprep.subr.mxu0 0.0
        %220 = vmatpush1.msra.mxu0 %v202
        %221 = vmatprep.subr.mxu0 0.0
        %222 = vmatpush1.msra.mxu0 %v203
        %223 = vmatprep.subr.mxu0 0.0
        %224 = vmatpush1.msra.mxu0 %v204
        %225 = vmatprep.subr.mxu0 0.0
        %226 = vmatpush1.msra.mxu0 %v205
        %227 = vmatprep.subr.mxu0 0.0
        %228 = vmatpush1.msra.mxu0 %v206
        %229 = vmatprep.subr.mxu0 0.0
        %230 = vmatpush1.msra.mxu0 %v207
        %231 = vmatprep.subr.mxu0 0.0
        %232 = vmatpush1.msra.mxu0 %v208
        %233 = vmatprep.subr.mxu0 0.0
        %234 = vmatpush1.msra.mxu0 %v209
        %235 = vmatprep.subr.mxu0 0.0
        %236 = vmatpush1.msra.mxu0 %v210
        %237 = vmatprep.subr.mxu0 0.0
        %238 = vmatpush1.msra.mxu0 %v211
        %239 = vmatprep.subr.mxu0 0.0
        %240 = vmatpush1.msra.mxu0 %v212
        %241 = vmatprep.subr.mxu0 0.0
        %242 = vmatpush1.msra.mxu0 %v213
        %243 = vmatprep.subr.mxu0 0.0
        %244 = vmatpush1.msra.mxu0 %v214
        %245 = vmatprep.subr.mxu0 0.0
        %246 = vmatpush1.msra.mxu0 %v215
        %247 = vmatprep.subr.mxu0 0.0
        %248 = vmatpush1.msra.mxu0 %v216
        %249 = vmatprep.subr.mxu0 0.0
        %250 = vmatpush1.msra.mxu0 0.0
        %251 = vmatprep.subr.mxu0 0.0
        %252 = vmatpush1.msra.mxu0 0.0
        %253 = vmatprep.subr.mxu0 0.0
        %254 = vmatpush1.msra.mxu0 0.0
        %255 = vmatprep.subr.mxu0 0.0
        %256 = vmatpush1.msra.mxu0 0.0
        %257 = vmatprep.subr.mxu0 0.0
        %258 = vmatpush1.msra.mxu0 0.0
        %259 = vmatprep.subr.mxu0 0.0
        %260 = vmatpush1.msra.mxu0 0.0
        %261 = vmatprep.subr.mxu0 0.0
        %262 = vmatpush1.msra.mxu0 0.0
        %263 = vmatprep.subr.mxu0 0.0
        %264 = vmatpush1.msra.mxu0 0.0
        %265 = vmatprep.subr.mxu0 0.0
        %266 = vmatpush1.msra.mxu0 0.0
        %267 = vmatprep.subr.mxu0 0.0
        %268 = vmatpush1.msra.mxu0 0.0
        %269 = vmatprep.subr.mxu0 0.0
        %270 = vmatpush1.msra.mxu0 0.0
        %271 = vmatprep.subr.mxu0 0.0
        %272 = vmatpush1.msra.mxu0 0.0
        %273 = vmatprep.subr.mxu0 0.0
        %274 = vmatpush1.msra.mxu0 0.0
        %275 = vmatprep.subr.mxu0 0.0
        %276 = vmatpush1.msra.mxu0 0.0
        %277 = vmatprep.subr.mxu0 0.0
        %278 = vmatpush1.msra.mxu0 0.0
        %279 = vmatprep.subr.mxu0 0.0
        %280 = vmatpush1.msra.mxu0 0.0
        %281 = vmatprep.mubr.f32.mxu0 0.0
        %282 = vmatmul.mubr.f32.gmra.mrb[0].mxu0 %v196
        %v283 = vpop.f32.mrb[0].mxu0
        %v284 = vadd.f32 0.0, %v283
        %v285 = vpop.f32.mrb[0].mxu0
        %286 = vmatprep.mubr.f32.mxu0 0.0
        %287 = vmatmul.mubr.f32.gmra.mrb[0].mxu0 %v197
        %v288 = vpop.f32.mrb[0].mxu0
        %v289 = vadd.f32 0.0, %v288
        %v290 = vpop.f32.mrb[0].mxu0
        %291 = vmatprep.mubr.f32.mxu0 0.0
        %292 = vmatmul.mubr.f32.gmra.mrb[0].mxu0 %v198
        %v293 = vpop.f32.mrb[0].mxu0
        %v294 = vadd.f32 0.0, %v293
        %v295 = vpop.f32.mrb[0].mxu0
        %296 = vmatprep.mubr.f32.mxu0 0.0
        %297 = vmatmul.mubr.f32.gmra.mrb[0].mxu0 %v199
        %v298 = vpop.f32.mrb[0].mxu0
        %v299 = vadd.f32 0.0, %v298
        %v300 = vpop.f32.mrb[0].mxu0
        %301 = vmatprep.mubr.f32.mxu0 0.0
        %302 = vmatmul.mubr.f32.gmra.mrb[0].mxu0 %v200
        %v303 = vpop.f32.mrb[0].mxu0
        %v304 = vadd.f32 0.0, %v303
        %v305 = vpop.f32.mrb[0].mxu0
        %306 = vdwg.mxu0
        %307 = vmatprep.subr.mxu0 0.0
        %308 = vmatpush1.msra.mxu0 %v201
        %309 = vmatprep.subr.mxu0 0.0
        %310 = vmatpush1.msra.mxu0 %v202
        %311 = vmatprep.subr.mxu0 0.0
        %312 = vmatpush1.msra.mxu0 %v203
        %313 = vmatprep.subr.mxu0 0.0
        %314 = vmatpush1.msra.mxu0 %v204
        %315 = vmatprep.subr.mxu0 0.0
        %316 = vmatpush1.msra.mxu0 %v205
        %317 = vmatprep.subr.mxu0 0.0
        %318 = vmatpush1.msra.mxu0 %v206
        %319 = vmatprep.subr.mxu0 0.0
        %320 = vmatpush1.msra.mxu0 %v207
        %321 = vmatprep.subr.mxu0 0.0
        %322 = vmatpush1.msra.mxu0 %v208
        %323 = vmatprep.subr.mxu0 0.0
        %324 = vmatpush1.msra.mxu0 %v209
        %325 = vmatprep.subr.mxu0 0.0
        %326 = vmatpush1.msra.mxu0 %v210
        %327 = vmatprep.subr.mxu0 0.0
        %328 = vmatpush1.msra.mxu0 %v211
        %329 = vmatprep.subr.mxu0 0.0
        %330 = vmatpush1.msra.mxu0 %v212
        %331 = vmatprep.subr.mxu0 0.0
        %332 = vmatpush1.msra.mxu0 %v213
        %333 = vmatprep.subr.mxu0 0.0
        %334 = vmatpush1.msra.mxu0 %v214
        %335 = vmatprep.subr.mxu0 0.0
        %336 = vmatpush1.msra.mxu0 %v215
        %337 = vmatprep.subr.mxu0 0.0
        %338 = vmatpush1.msra.mxu0 %v216
        %339 = vmatprep.subr.mxu0 0.0
        %340 = vmatpush1.msra.mxu0 0.0
        %341 = vmatprep.subr.mxu0 0.0
        %342 = vmatpush1.msra.mxu0 0.0
        %343 = vmatprep.subr.mxu0 0.0
        %344 = vmatpush1.msra.mxu0 0.0
        %345 = vmatprep.subr.mxu0 0.0
        %346 = vmatpush1.msra.mxu0 0.0
        %347 = vmatprep.subr.mxu0 0.0
        %348 = vmatpush1.msra.mxu0 0.0
        %349 = vmatprep.subr.mxu0 0.0
        %350 = vmatpush1.msra.mxu0 0.0
        %351 = vmatprep.subr.mxu0 0.0
        %352 = vmatpush1.msra.mxu0 0.0
        %353 = vmatprep.subr.mxu0 0.0
        %354 = vmatpush1.msra.mxu0 0.0
        %355 = vmatprep.subr.mxu0 0.0
        %356 = vmatpush1.msra.mxu0 0.0
        %357 = vmatprep.subr.mxu0 0.0
        %358 = vmatpush1.msra.mxu0 0.0
        %359 = vmatprep.subr.mxu0 0.0
        %360 = vmatpush1.msra.mxu0 0.0
        %361 = vmatprep.subr.mxu0 0.0
        %362 = vmatpush1.msra.mxu0 0.0
        %363 = vmatprep.subr.mxu0 0.0
        %364 = vmatpush1.msra.mxu0 0.0
        %365 = vmatprep.subr.mxu0 0.0
        %366 = vmatpush1.msra.mxu0 0.0
        %367 = vmatprep.subr.mxu0 0.0
        %368 = vmatpush1.msra.mxu0 0.0
        %369 = vmatprep.subr.mxu0 0.0
        %370 = vmatpush1.msra.mxu0 0.0
        %371 = vmatprep.mubr.f32.mxu0 0.0
        %372 = vmatmul.mubr.f32.gmra.mrb[0].mxu0 %v284
        %v373 = vpop.f32.mrb[0].mxu0
        %v374 = vadd.f32 0.0, %v373
        %v375 = vpop.f32.mrb[0].mxu0
        %376 = vmatprep.mubr.f32.mxu0 0.0
        %377 = vmatmul.mubr.f32.gmra.mrb[0].mxu0 %v289
        %v378 = vpop.f32.mrb[0].mxu0
        %v379 = vadd.f32 0.0, %v378
        %v380 = vpop.f32.mrb[0].mxu0
        %381 = vmatprep.mubr.f32.mxu0 0.0
        %382 = vmatmul.mubr.f32.gmra.mrb[0].mxu0 %v294
        %v383 = vpop.f32.mrb[0].mxu0
        %v384 = vadd.f32 0.0, %v383
        %v385 = vpop.f32.mrb[0].mxu0
        %386 = vmatprep.mubr.f32.mxu0 0.0
        %387 = vmatmul.mubr.f32.gmra.mrb[0].mxu0 %v299
        %v388 = vpop.f32.mrb[0].mxu0
        %v389 = vadd.f32 0.0, %v388
        %v390 = vpop.f32.mrb[0].mxu0
        %391 = vmatprep.mubr.f32.mxu0 0.0
        %392 = vmatmul.mubr.f32.gmra.mrb[0].mxu0 %v304
        %v393 = vpop.f32.mrb[0].mxu0
        %v394 = vadd.f32 0.0, %v393
        %v395 = vpop.f32.mrb[0].mxu0
        %396 = vdwg.mxu0
        %v397 = vmul.f32 %v374, 2.0
        %v398 = vmul.f32 %v379, 2.0
        %v399 = vmul.f32 %v384, 2.0
        %v400 = vmul.f32 %v389, 2.0
        %v401 = vmul.f32 %v394, 2.0
        %v402 = vsub.f32 %v397, %v196
        %v403 = vsub.f32 %v398, %v197
        %v404 = vsub.f32 %v399, %v198
        %v405 = vsub.f32 %v400, %v199
        %v406 = vsub.f32 %v401, %v200
        %s407 = scalar_lea.vmem %s0, 128
        %v408 = vld [vmem:[%s407] sm:$0xff]
        %v409 = vld [vmem:[%s407 + $0x8] sm:$0xff]
        %v410 = vld [vmem:[%s407 + $0x10] sm:$0xff]
        %v411 = vld [vmem:[%s407 + $0x18] sm:$0xff]
        %v412 = vld [vmem:[%s407 + $0x20] sm:$0xff]
        %v413 = vld [vmem:[%s407 + $0x28] sm:$0xff]
        %v414 = vld [vmem:[%s407 + $0x30] sm:$0xff]
        %v415 = vld [vmem:[%s407 + $0x38] sm:$0xff]
        %v416 = vld [vmem:[%s407 + $0x40] sm:$0xff]
        %v417 = vld [vmem:[%s407 + $0x48] sm:$0xff]
        %v418 = vld [vmem:[%s407 + $0x50] sm:$0xff]
        %v419 = vld [vmem:[%s407 + $0x58] sm:$0xff]
        %v420 = vld [vmem:[%s407 + $0x60] sm:$0xff]
        %v421 = vld [vmem:[%s407 + $0x68] sm:$0xff]
        %v422 = vld [vmem:[%s407 + $0x70] sm:$0xff]
        %v423 = vld [vmem:[%s407 + $0x78] sm:$0xff]
        %424 = vmatprep.subr.mxu0 0.0
        %425 = vmatpush1.msra.mxu0 %v408
        %426 = vmatprep.subr.mxu0 0.0
        %427 = vmatpush1.msra.mxu0 %v409
        %428 = vmatprep.subr.mxu0 0.0
        %429 = vmatpush1.msra.mxu0 %v410
        %430 = vmatprep.subr.mxu0 0.0
        %431 = vmatpush1.msra.mxu0 %v411
        %432 = vmatprep.subr.mxu0 0.0
        %433 = vmatpush1.msra.mxu0 %v412
        %434 = vmatprep.subr.mxu0 0.0
        %435 = vmatpush1.msra.mxu0 %v413
        %436 = vmatprep.subr.mxu0 0.0
        %437 = vmatpush1.msra.mxu0 %v414
        %438 = vmatprep.subr.mxu0 0.0
        %439 = vmatpush1.msra.mxu0 %v415
        %440 = vmatprep.subr.mxu0 0.0
        %441 = vmatpush1.msra.mxu0 %v416
        %442 = vmatprep.subr.mxu0 0.0
        %443 = vmatpush1.msra.mxu0 %v417
        %444 = vmatprep.subr.mxu0 0.0
        %445 = vmatpush1.msra.mxu0 %v418
        %446 = vmatprep.subr.mxu0 0.0
        %447 = vmatpush1.msra.mxu0 %v419
        %448 = vmatprep.subr.mxu0 0.0
        %449 = vmatpush1.msra.mxu0 %v420
        %450 = vmatprep.subr.mxu0 0.0
        %451 = vmatpush1.msra.mxu0 %v421
        %452 = vmatprep.subr.mxu0 0.0
        %453 = vmatpush1.msra.mxu0 %v422
        %454 = vmatprep.subr.mxu0 0.0
        %455 = vmatpush1.msra.mxu0 %v423
        %456 = vmatprep.subr.mxu0 0.0
        %457 = vmatpush1.msra.mxu0 0.0
        %458 = vmatprep.subr.mxu0 0.0
        %459 = vmatpush1.msra.mxu0 0.0
        %460 = vmatprep.subr.mxu0 0.0
        %461 = vmatpush1.msra.mxu0 0.0
        %462 = vmatprep.subr.mxu0 0.0
        %463 = vmatpush1.msra.mxu0 0.0
        %464 = vmatprep.subr.mxu0 0.0
        %465 = vmatpush1.msra.mxu0 0.0
        %466 = vmatprep.subr.mxu0 0.0
        %467 = vmatpush1.msra.mxu0 0.0
        %468 = vmatprep.subr.mxu0 0.0
        %469 = vmatpush1.msra.mxu0 0.0
        %470 = vmatprep.subr.mxu0 0.0
        %471 = vmatpush1.msra.mxu0 0.0
        %472 = vmatprep.subr.mxu0 0.0
        %473 = vmatpush1.msra.mxu0 0.0
        %474 = vmatprep.subr.mxu0 0.0
        %475 = vmatpush1.msra.mxu0 0.0
        %476 = vmatprep.subr.mxu0 0.0
        %477 = vmatpush1.msra.mxu0 0.0
        %478 = vmatprep.subr.mxu0 0.0
        %479 = vmatpush1.msra.mxu0 0.0
        %480 = vmatprep.subr.mxu0 0.0
        %481 = vmatpush1.msra.mxu0 0.0
        %482 = vmatprep.subr.mxu0 0.0
        %483 = vmatpush1.msra.mxu0 0.0
        %484 = vmatprep.subr.mxu0 0.0
        %485 = vmatpush1.msra.mxu0 0.0
        %486 = vmatprep.subr.mxu0 0.0
        %487 = vmatpush1.msra.mxu0 0.0
        %488 = vmatprep.mubr.f32.mxu0 0.0
        %489 = vmatmul.mubr.f32.gmra.mrb[0].mxu0 %v284
        %v490 = vpop.f32.mrb[0].mxu0
        %v491 = vadd.f32 0.0, %v490
        %v492 = vpop.f32.mrb[0].mxu0
        %493 = vmatprep.mubr.f32.mxu0 0.0
        %494 = vmatmul.mubr.f32.gmra.mrb[0].mxu0 %v289
        %v495 = vpop.f32.mrb[0].mxu0
        %v496 = vadd.f32 0.0, %v495
        %v497 = vpop.f32.mrb[0].mxu0
        %498 = vmatprep.mubr.f32.mxu0 0.0
        %499 = vmatmul.mubr.f32.gmra.mrb[0].mxu0 %v294
        %v500 = vpop.f32.mrb[0].mxu0
        %v501 = vadd.f32 0.0, %v500
        %v502 = vpop.f32.mrb[0].mxu0
        %503 = vmatprep.mubr.f32.mxu0 0.0
        %504 = vmatmul.mubr.f32.gmra.mrb[0].mxu0 %v299
        %v505 = vpop.f32.mrb[0].mxu0
        %v506 = vadd.f32 0.0, %v505
        %v507 = vpop.f32.mrb[0].mxu0
        %508 = vmatprep.mubr.f32.mxu0 0.0
        %509 = vmatmul.mubr.f32.gmra.mrb[0].mxu0 %v304
        %v510 = vpop.f32.mrb[0].mxu0
        %v511 = vadd.f32 0.0, %v510
        %v512 = vpop.f32.mrb[0].mxu0
        %513 = vdwg.mxu0
        %514 = vmatprep.subr.mxu0 0.0
        %515 = vmatpush1.msra.mxu0 %v408
        %516 = vmatprep.subr.mxu0 0.0
        %517 = vmatpush1.msra.mxu0 %v409
        %518 = vmatprep.subr.mxu0 0.0
        %519 = vmatpush1.msra.mxu0 %v410
        %520 = vmatprep.subr.mxu0 0.0
        %521 = vmatpush1.msra.mxu0 %v411
        %522 = vmatprep.subr.mxu0 0.0
        %523 = vmatpush1.msra.mxu0 %v412
        %524 = vmatprep.subr.mxu0 0.0
        %525 = vmatpush1.msra.mxu0 %v413
        %526 = vmatprep.subr.mxu0 0.0
        %527 = vmatpush1.msra.mxu0 %v414
        %528 = vmatprep.subr.mxu0 0.0
        %529 = vmatpush1.msra.mxu0 %v415
        %530 = vmatprep.subr.mxu0 0.0
        %531 = vmatpush1.msra.mxu0 %v416
        %532 = vmatprep.subr.mxu0 0.0
        %533 = vmatpush1.msra.mxu0 %v417
        %534 = vmatprep.subr.mxu0 0.0
        %535 = vmatpush1.msra.mxu0 %v418
        %536 = vmatprep.subr.mxu0 0.0
        %537 = vmatpush1.msra.mxu0 %v419
        %538 = vmatprep.subr.mxu0 0.0
        %539 = vmatpush1.msra.mxu0 %v420
        %540 = vmatprep.subr.mxu0 0.0
        %541 = vmatpush1.msra.mxu0 %v421
        %542 = vmatprep.subr.mxu0 0.0
        %543 = vmatpush1.msra.mxu0 %v422
        %544 = vmatprep.subr.mxu0 0.0
        %545 = vmatpush1.msra.mxu0 %v423
        %546 = vmatprep.subr.mxu0 0.0
        %547 = vmatpush1.msra.mxu0 0.0
        %548 = vmatprep.subr.mxu0 0.0
        %549 = vmatpush1.msra.mxu0 0.0
        %550 = vmatprep.subr.mxu0 0.0
        %551 = vmatpush1.msra.mxu0 0.0
        %552 = vmatprep.subr.mxu0 0.0
        %553 = vmatpush1.msra.mxu0 0.0
        %554 = vmatprep.subr.mxu0 0.0
        %555 = vmatpush1.msra.mxu0 0.0
        %556 = vmatprep.subr.mxu0 0.0
        %557 = vmatpush1.msra.mxu0 0.0
        %558 = vmatprep.subr.mxu0 0.0
        %559 = vmatpush1.msra.mxu0 0.0
        %560 = vmatprep.subr.mxu0 0.0
        %561 = vmatpush1.msra.mxu0 0.0
        %562 = vmatprep.subr.mxu0 0.0
        %563 = vmatpush1.msra.mxu0 0.0
        %564 = vmatprep.subr.mxu0 0.0
        %565 = vmatpush1.msra.mxu0 0.0
        %566 = vmatprep.subr.mxu0 0.0
        %567 = vmatpush1.msra.mxu0 0.0
        %568 = vmatprep.subr.mxu0 0.0
        %569 = vmatpush1.msra.mxu0 0.0
        %570 = vmatprep.subr.mxu0 0.0
        %571 = vmatpush1.msra.mxu0 0.0
        %572 = vmatprep.subr.mxu0 0.0
        %573 = vmatpush1.msra.mxu0 0.0
        %574 = vmatprep.subr.mxu0 0.0
        %575 = vmatpush1.msra.mxu0 0.0
        %576 = vmatprep.subr.mxu0 0.0
        %577 = vmatpush1.msra.mxu0 0.0
        %578 = vmatprep.mubr.f32.mxu0 0.0
        %579 = vmatmul.mubr.f32.gmra.mrb[0].mxu0 %v491
        %v580 = vpop.f32.mrb[0].mxu0
        %v581 = vadd.f32 0.0, %v580
        %v582 = vpop.f32.mrb[0].mxu0
        %583 = vmatprep.mubr.f32.mxu0 0.0
        %584 = vmatmul.mubr.f32.gmra.mrb[0].mxu0 %v496
        %v585 = vpop.f32.mrb[0].mxu0
        %v586 = vadd.f32 0.0, %v585
        %v587 = vpop.f32.mrb[0].mxu0
        %588 = vmatprep.mubr.f32.mxu0 0.0
        %589 = vmatmul.mubr.f32.gmra.mrb[0].mxu0 %v501
        %v590 = vpop.f32.mrb[0].mxu0
        %v591 = vadd.f32 0.0, %v590
        %v592 = vpop.f32.mrb[0].mxu0
        %593 = vmatprep.mubr.f32.mxu0 0.0
        %594 = vmatmul.mubr.f32.gmra.mrb[0].mxu0 %v506
        %v595 = vpop.f32.mrb[0].mxu0
        %v596 = vadd.f32 0.0, %v595
        %v597 = vpop.f32.mrb[0].mxu0
        %598 = vmatprep.mubr.f32.mxu0 0.0
        %599 = vmatmul.mubr.f32.gmra.mrb[0].mxu0 %v511
        %v600 = vpop.f32.mrb[0].mxu0
        %v601 = vadd.f32 0.0, %v600
        %v602 = vpop.f32.mrb[0].mxu0
        %603 = vdwg.mxu0
        %v604 = vmul.f32 %v581, 2.0
        %v605 = vmul.f32 %v586, 2.0
        %v606 = vmul.f32 %v591, 2.0
        %v607 = vmul.f32 %v596, 2.0
        %v608 = vmul.f32 %v601, 2.0
        %v609 = vsub.f32 %v604, %v284
        %v610 = vsub.f32 %v605, %v289
        %v611 = vsub.f32 %v606, %v294
        %v612 = vsub.f32 %v607, %v299
        %v613 = vsub.f32 %v608, %v304
        %v614 = vld [vmem:[%s2] sm:$0xff]
        %v615 = vld [vmem:[%s2 + $0x8] sm:$0xff]
        %v616 = vld [vmem:[%s2 + $0x10] sm:$0xff]
        %v617 = vld [vmem:[%s2 + $0x18] sm:$0xff]
        %v618 = vld [vmem:[%s2 + $0x20] sm:$0xff]
        %v619 = vld [vmem:[%s2 + $0x28] sm:$0xff]
        %v620 = vld [vmem:[%s2 + $0x30] sm:$0xff]
        %v621 = vld [vmem:[%s2 + $0x38] sm:$0xff]
        %v622 = vld [vmem:[%s2 + $0x40] sm:$0xff]
        %v623 = vld [vmem:[%s2 + $0x48] sm:$0xff]
        %v624 = vld [vmem:[%s2 + $0x50] sm:$0xff]
        %v625 = vld [vmem:[%s2 + $0x58] sm:$0xff]
        %v626 = vld [vmem:[%s2 + $0x60] sm:$0xff]
        %v627 = vld [vmem:[%s2 + $0x68] sm:$0xff]
        %v628 = vld [vmem:[%s2 + $0x70] sm:$0xff]
        %v629 = vld [vmem:[%s2 + $0x78] sm:$0xff]
        %v630 = vld [vmem:[%s2 + $0x80] sm:$0xff]
        %v631 = vld [vmem:[%s2 + $0x88] sm:$0xff]
        %v632 = vld [vmem:[%s2 + $0x90] sm:$0xff]
        %v633 = vld [vmem:[%s2 + $0x98] sm:$0xff]
        %v634 = vld [vmem:[%s2 + $0xa0] sm:$0xff]
        %v635 = vld [vmem:[%s2 + $0xa8] sm:$0xff]
        %v636 = vld [vmem:[%s2 + $0xb0] sm:$0xff]
        %v637 = vld [vmem:[%s2 + $0xb8] sm:$0xff]
        %v638 = vld [vmem:[%s2 + $0xc0] sm:$0xff]
        %v639 = vld [vmem:[%s2 + $0xc8] sm:$0xff]
        %v640 = vld [vmem:[%s2 + $0xd0] sm:$0xff]
        %v641 = vld [vmem:[%s2 + $0xd8] sm:$0xff]
        %v642 = vld [vmem:[%s2 + $0xe0] sm:$0xff]
        %v643 = vld [vmem:[%s2 + $0xe8] sm:$0xff]
        %v644 = vld [vmem:[%s2 + $0xf0] sm:$0xff]
        %v645 = vld [vmem:[%s2 + $0xf8] sm:$0xff]
        %v646 = vld [vmem:[%s3] sm:$0xff]
        %v647 = vld [vmem:[%s3 + $0x8] sm:$0xff]
        %v648 = vld [vmem:[%s3 + $0x10] sm:$0xff]
        %v649 = vld [vmem:[%s3 + $0x18] sm:$0xff]
        %v650 = vld [vmem:[%s3 + $0x20] sm:$0xff]
        %v651 = vld [vmem:[%s3 + $0x28] sm:$0xff]
        %v652 = vld [vmem:[%s3 + $0x30] sm:$0xff]
        %v653 = vld [vmem:[%s3 + $0x38] sm:$0xff]
        %v654 = vld [vmem:[%s3 + $0x40] sm:$0xff]
        %v655 = vld [vmem:[%s3 + $0x48] sm:$0xff]
        %v656 = vld [vmem:[%s3 + $0x50] sm:$0xff]
        %v657 = vld [vmem:[%s3 + $0x58] sm:$0xff]
        %v658 = vld [vmem:[%s3 + $0x60] sm:$0xff]
        %v659 = vld [vmem:[%s3 + $0x68] sm:$0xff]
        %v660 = vld [vmem:[%s3 + $0x70] sm:$0xff]
        %v661 = vld [vmem:[%s3 + $0x78] sm:$0xff]
        %663 = vset.pattern.permute.xlu0 0
        %664 = vperm.xlu0 %663, %v646
        %v665 = vpop.permute.xlu0 %664
        %668 = vset.pattern.permute.xlu0 0
        %669 = vperm.xlu0 %668, %v647
        %v670 = vpop.permute.xlu0 %669
        %673 = vset.pattern.permute.xlu0 0
        %674 = vperm.xlu0 %673, %v648
        %v675 = vpop.permute.xlu0 %674
        %678 = vset.pattern.permute.xlu0 0
        %679 = vperm.xlu0 %678, %v649
        %v680 = vpop.permute.xlu0 %679
        %683 = vset.pattern.permute.xlu0 0
        %684 = vperm.xlu0 %683, %v650
        %v685 = vpop.permute.xlu0 %684
        %688 = vset.pattern.permute.xlu0 0
        %689 = vperm.xlu0 %688, %v651
        %v690 = vpop.permute.xlu0 %689
        %693 = vset.pattern.permute.xlu0 0
        %694 = vperm.xlu0 %693, %v652
        %v695 = vpop.permute.xlu0 %694
        %698 = vset.pattern.permute.xlu0 0
        %699 = vperm.xlu0 %698, %v653
        %v700 = vpop.permute.xlu0 %699
        %703 = vset.pattern.permute.xlu0 0
        %704 = vperm.xlu0 %703, %v654
        %v705 = vpop.permute.xlu0 %704
        %708 = vset.pattern.permute.xlu0 0
        %709 = vperm.xlu0 %708, %v655
        %v710 = vpop.permute.xlu0 %709
        %713 = vset.pattern.permute.xlu0 0
        %714 = vperm.xlu0 %713, %v656
        %v715 = vpop.permute.xlu0 %714
        %718 = vset.pattern.permute.xlu0 0
        %719 = vperm.xlu0 %718, %v657
        %v720 = vpop.permute.xlu0 %719
        %723 = vset.pattern.permute.xlu0 0
        %724 = vperm.xlu0 %723, %v658
        %v725 = vpop.permute.xlu0 %724
        %728 = vset.pattern.permute.xlu0 0
        %729 = vperm.xlu0 %728, %v659
        %v730 = vpop.permute.xlu0 %729
        %733 = vset.pattern.permute.xlu0 0
        %734 = vperm.xlu0 %733, %v660
        %v735 = vpop.permute.xlu0 %734
        %738 = vset.pattern.permute.xlu0 0
        %739 = vperm.xlu0 %738, %v661
        %v740 = vpop.permute.xlu0 %739
        %vm742 = vcmask 588800
        %v744 = vsel %vm742, %v615, 0
        %v747 = vsel %vm742, %v617, 0
        %v750 = vsel %vm742, %v619, 0
        %v753 = vsel %vm742, %v621, 0
        %v756 = vsel %vm742, %v623, 0
        %v759 = vsel %vm742, %v625, 0
        %v762 = vsel %vm742, %v627, 0
        %v765 = vsel %vm742, %v629, 0
        %v768 = vsel %vm742, %v631, 0
        %v771 = vsel %vm742, %v633, 0
        %v774 = vsel %vm742, %v635, 0
        %v777 = vsel %vm742, %v637, 0
        %v780 = vsel %vm742, %v639, 0
        %v783 = vsel %vm742, %v641, 0
        %v786 = vsel %vm742, %v643, 0
        %v789 = vsel %vm742, %v645, 0
        %791 = vmatprep.subr.mxu0 0.0
        %792 = vmatpush1.msra.mxu0 %v196
        %793 = vmatprep.subr.mxu0 0.0
        %794 = vmatpush1.msra.mxu0 %v197
        %795 = vmatprep.subr.mxu0 0.0
        %796 = vmatpush1.msra.mxu0 %v198
        %797 = vmatprep.subr.mxu0 0.0
        %798 = vmatpush1.msra.mxu0 %v199
        %799 = vmatprep.subr.mxu0 0.0
        %800 = vmatpush1.msra.mxu0 %v200
        %801 = vmatprep.subr.mxu0 0.0
        %802 = vmatpush1.msra.mxu0 %v284
        %803 = vmatprep.subr.mxu0 0.0
        %804 = vmatpush1.msra.mxu0 %v289
        %805 = vmatprep.subr.mxu0 0.0
        %806 = vmatpush1.msra.mxu0 %v294
        %807 = vmatprep.subr.mxu0 0.0
        %808 = vmatpush1.msra.mxu0 %v299
        %809 = vmatprep.subr.mxu0 0.0
        %810 = vmatpush1.msra.mxu0 %v304
        %811 = vmatprep.subr.mxu0 0.0
        %812 = vmatpush1.msra.mxu0 %v402
        %813 = vmatprep.subr.mxu0 0.0
        %814 = vmatpush1.msra.mxu0 %v403
        %815 = vmatprep.subr.mxu0 0.0
        %816 = vmatpush1.msra.mxu0 %v404
        %817 = vmatprep.subr.mxu0 0.0
        %818 = vmatpush1.msra.mxu0 %v405
        %819 = vmatprep.subr.mxu0 0.0
        %820 = vmatpush1.msra.mxu0 %v406
        %821 = vmatprep.subr.mxu0 0.0
        %822 = vmatpush1.msra.mxu0 %v491
        %823 = vmatprep.subr.mxu0 0.0
        %824 = vmatpush1.msra.mxu0 %v496
        %825 = vmatprep.subr.mxu0 0.0
        %826 = vmatpush1.msra.mxu0 %v501
        %827 = vmatprep.subr.mxu0 0.0
        %828 = vmatpush1.msra.mxu0 %v506
        %829 = vmatprep.subr.mxu0 0.0
        %830 = vmatpush1.msra.mxu0 %v511
        %831 = vmatprep.subr.mxu0 0.0
        %832 = vmatpush1.msra.mxu0 %v609
        %833 = vmatprep.subr.mxu0 0.0
        %834 = vmatpush1.msra.mxu0 %v610
        %835 = vmatprep.subr.mxu0 0.0
        %836 = vmatpush1.msra.mxu0 %v611
        %837 = vmatprep.subr.mxu0 0.0
        %838 = vmatpush1.msra.mxu0 %v612
        %839 = vmatprep.subr.mxu0 0.0
        %840 = vmatpush1.msra.mxu0 %v613
        %841 = vmatprep.subr.mxu0 0.0
        %842 = vmatpush1.msra.mxu0 0.0
        %843 = vmatprep.subr.mxu0 0.0
        %844 = vmatpush1.msra.mxu0 0.0
        %845 = vmatprep.subr.mxu0 0.0
        %846 = vmatpush1.msra.mxu0 0.0
        %847 = vmatprep.subr.mxu0 0.0
        %848 = vmatpush1.msra.mxu0 0.0
        %849 = vmatprep.subr.mxu0 0.0
        %850 = vmatpush1.msra.mxu0 0.0
        %851 = vmatprep.subr.mxu0 0.0
        %852 = vmatpush1.msra.mxu0 0.0
        %853 = vmatprep.subr.mxu0 0.0
        %854 = vmatpush1.msra.mxu0 0.0
        %855 = vmatprep.mubr.f32.mxu0 %v744
        %856 = vmatmul.mubr.f32.gmra.mrb[0].mxu0 %v614
        %v857 = vpop.f32.mrb[0].mxu0
        %v858 = vadd.f32 %v665, %v857
        %v859 = vpop.f32.mrb[0].mxu0
        %860 = vmatprep.mubr.f32.mxu0 %v747
        %861 = vmatmul.mubr.f32.gmra.mrb[0].mxu0 %v616
        %v862 = vpop.f32.mrb[0].mxu0
        %v863 = vadd.f32 %v670, %v862
        %v864 = vpop.f32.mrb[0].mxu0
        %865 = vmatprep.mubr.f32.mxu0 %v750
        %866 = vmatmul.mubr.f32.gmra.mrb[0].mxu0 %v618
        %v867 = vpop.f32.mrb[0].mxu0
        %v868 = vadd.f32 %v675, %v867
        %v869 = vpop.f32.mrb[0].mxu0
        %870 = vmatprep.mubr.f32.mxu0 %v753
        %871 = vmatmul.mubr.f32.gmra.mrb[0].mxu0 %v620
        %v872 = vpop.f32.mrb[0].mxu0
        %v873 = vadd.f32 %v680, %v872
        %v874 = vpop.f32.mrb[0].mxu0
        %875 = vmatprep.mubr.f32.mxu0 %v756
        %876 = vmatmul.mubr.f32.gmra.mrb[0].mxu0 %v622
        %v877 = vpop.f32.mrb[0].mxu0
        %v878 = vadd.f32 %v685, %v877
        %v879 = vpop.f32.mrb[0].mxu0
        %880 = vmatprep.mubr.f32.mxu0 %v759
        %881 = vmatmul.mubr.f32.gmra.mrb[0].mxu0 %v624
        %v882 = vpop.f32.mrb[0].mxu0
        %v883 = vadd.f32 %v690, %v882
        %v884 = vpop.f32.mrb[0].mxu0
        %885 = vmatprep.mubr.f32.mxu0 %v762
        %886 = vmatmul.mubr.f32.gmra.mrb[0].mxu0 %v626
        %v887 = vpop.f32.mrb[0].mxu0
        %v888 = vadd.f32 %v695, %v887
        %v889 = vpop.f32.mrb[0].mxu0
        %890 = vmatprep.mubr.f32.mxu0 %v765
        %891 = vmatmul.mubr.f32.gmra.mrb[0].mxu0 %v628
        %v892 = vpop.f32.mrb[0].mxu0
        %v893 = vadd.f32 %v700, %v892
        %v894 = vpop.f32.mrb[0].mxu0
        %895 = vmatprep.mubr.f32.mxu0 %v768
        %896 = vmatmul.mubr.f32.gmra.mrb[0].mxu0 %v630
        %v897 = vpop.f32.mrb[0].mxu0
        %v898 = vadd.f32 %v705, %v897
        %v899 = vpop.f32.mrb[0].mxu0
        %900 = vmatprep.mubr.f32.mxu0 %v771
        %901 = vmatmul.mubr.f32.gmra.mrb[0].mxu0 %v632
        %v902 = vpop.f32.mrb[0].mxu0
        %v903 = vadd.f32 %v710, %v902
        %v904 = vpop.f32.mrb[0].mxu0
        %905 = vmatprep.mubr.f32.mxu0 %v774
        %906 = vmatmul.mubr.f32.gmra.mrb[0].mxu0 %v634
        %v907 = vpop.f32.mrb[0].mxu0
        %v908 = vadd.f32 %v715, %v907
        %v909 = vpop.f32.mrb[0].mxu0
        %910 = vmatprep.mubr.f32.mxu0 %v777
        %911 = vmatmul.mubr.f32.gmra.mrb[0].mxu0 %v636
        %v912 = vpop.f32.mrb[0].mxu0
        %v913 = vadd.f32 %v720, %v912
        %v914 = vpop.f32.mrb[0].mxu0
        %915 = vmatprep.mubr.f32.mxu0 %v780
        %916 = vmatmul.mubr.f32.gmra.mrb[0].mxu0 %v638
        %v917 = vpop.f32.mrb[0].mxu0
        %v918 = vadd.f32 %v725, %v917
        %v919 = vpop.f32.mrb[0].mxu0
        %920 = vmatprep.mubr.f32.mxu0 %v783
        %921 = vmatmul.mubr.f32.gmra.mrb[0].mxu0 %v640
        %v922 = vpop.f32.mrb[0].mxu0
        %v923 = vadd.f32 %v730, %v922
        %v924 = vpop.f32.mrb[0].mxu0
        %925 = vmatprep.mubr.f32.mxu0 %v786
        %926 = vmatmul.mubr.f32.gmra.mrb[0].mxu0 %v642
        %v927 = vpop.f32.mrb[0].mxu0
        %v928 = vadd.f32 %v735, %v927
        %v929 = vpop.f32.mrb[0].mxu0
        %930 = vmatprep.mubr.f32.mxu0 %v789
        %931 = vmatmul.mubr.f32.gmra.mrb[0].mxu0 %v644
        %v932 = vpop.f32.mrb[0].mxu0
        %v933 = vadd.f32 %v740, %v932
        %v934 = vpop.f32.mrb[0].mxu0
        %935 = vdwg.mxu0
        %v936 = vtanh.pop %v858
        %v937 = vtanh.pop %v863
        %v938 = vtanh.pop %v868
        %v939 = vtanh.pop %v873
        %v940 = vtanh.pop %v878
        %v941 = vtanh.pop %v883
        %v942 = vtanh.pop %v888
        %v943 = vtanh.pop %v893
        %v944 = vtanh.pop %v898
        %v945 = vtanh.pop %v903
        %v946 = vtanh.pop %v908
        %v947 = vtanh.pop %v913
        %v948 = vtanh.pop %v918
        %v949 = vtanh.pop %v923
        %v950 = vtanh.pop %v928
        %v951 = vtanh.pop %v933
        %952 = vst [vmem:[%s190] sm:$0xff] %v936
        %953 = vst [vmem:[%s190 + $0x8] sm:$0xff] %v937
        %954 = vst [vmem:[%s190 + $0x10] sm:$0xff] %v938
        %955 = vst [vmem:[%s190 + $0x18] sm:$0xff] %v939
        %956 = vst [vmem:[%s190 + $0x20] sm:$0xff] %v940
        %957 = vst [vmem:[%s190 + $0x28] sm:$0xff] %v941
        %958 = vst [vmem:[%s190 + $0x30] sm:$0xff] %v942
        %959 = vst [vmem:[%s190 + $0x38] sm:$0xff] %v943
        %960 = vst [vmem:[%s190 + $0x40] sm:$0xff] %v944
        %961 = vst [vmem:[%s190 + $0x48] sm:$0xff] %v945
        %962 = vst [vmem:[%s190 + $0x50] sm:$0xff] %v946
        %963 = vst [vmem:[%s190 + $0x58] sm:$0xff] %v947
        %964 = vst [vmem:[%s190 + $0x60] sm:$0xff] %v948
        %965 = vst [vmem:[%s190 + $0x68] sm:$0xff] %v949
        %966 = vst [vmem:[%s190 + $0x70] sm:$0xff] %v950
        %967 = vst [vmem:[%s190 + $0x78] sm:$0xff] %v951
        %s968 = sand.u32 %s115, 1
        %s969 = scalar_lea.sflag [#allocation3], %s968
        %s970 = sand.u32 %s115, 1
        %s971 = smul.addr %s970, 128
        %s972 = scalar_lea.vmem [#allocation2], %s971
        // Predicated region
        $region37: #{tpu_custom_call.1} parent=35 // pred_check
          %p973 = pneg %p125
        $region38: #{tpu_custom_call.1} parent=35 // pred_check_branch
          %975 = sbr.rel (%p973) target = $region40
        $region39: #{tpu_custom_call.1} parent=35 // pred_region
          %s977 = ssub.s32 2048, 2048
          %978 = vsyncadd %s969, %s977
          %s979 = smul.addr %s18, 16
          %s980 = smul.addr %s979, 128
          %s981 = scalar_lea.hbm %s4, %s980
          %s982 = sshll.u32 %s972, 4
          %s983 = int_to_ptr.vmem [resolvable:$true] %s982
          %988 = dma.vmem_to_hbm [thread:$0]  %s983, 2048, %s981, %s969, 128, 128, 8
        $region40: #{tpu_custom_call.1} parent=35 // pred_fallthru
          _
      $region36: #{tpu_custom_call.1} parent=5 // pred_fallthru
        _
      %p989 = scmp.le.s32.totalorder 2, %s13
      // Predicated region
      $region41: #{tpu_custom_call.1} parent=5 // pred_check
        %p990 = pneg %p989
      $region42: #{tpu_custom_call.1} parent=5 // pred_check_branch
        %992 = sbr.rel (%p990) target = $region44
      $region43: #{tpu_custom_call.1} parent=5 // pred_region
        %s993 = ssub.s32 %s13, 2
        // Predicated region
        $region45: #{tpu_custom_call.1} parent=43 // pred_check
          %p994 = pneg %p131
        $region46: #{tpu_custom_call.1} parent=43 // pred_check_branch
          %996 = sbr.rel (%p994) target = $region48
        $region47: #{tpu_custom_call.1} parent=43 // pred_region
          %s997 = sand.u32 %s116, 1
          %s998 = scalar_lea.sflag [#allocation3], %s997
          %s999 = sand.u32 %s116, 1
          %s1000 = smul.addr %s999, 128
          %s1001 = scalar_lea.vmem [#allocation2], %s1000
          %1002 = dma.done %s998, 2048
        $region48: #{tpu_custom_call.1} parent=43 // pred_fallthru
          _
      $region44: #{tpu_custom_call.1} parent=5 // pred_fallthru
        _
    $region6: #{tpu_custom_call.1} parent=1 // loop_footer
      %s17 = sadd.s32 1, %s13
    $region7: #{tpu_custom_call.1} parent=1 // loop_footer_branch
      %12 = sbr.rel target = $region3
    $region8: #{tpu_custom_call.1} parent=1 // loop_exit
      _
    %1003 = vsyncpa [#allocation3], 1
    %s1004 = scalar_lea.sflag [#allocation3], 1
    %1005 = vsyncpa %s1004, 1

</llo_original>
